<compile_context>
chip_gen: v5e
topology: v5e:2x2
jax: 0.10.0
libtpu: 0.0.40
codegen_flags: <defaults>
</compile_context>

<pallas_src>
import functools

import jax
import jax.numpy as jnp
from jax.experimental import pallas as pl
from jax.experimental.pallas import tpu as pltpu

LN_EPS = 1e-5          # torch.nn.LayerNorm default
LEAKY_SLOPE = 0.01     # torch.nn.LeakyReLU default negative_slope


def _round_up(x, m):
    return (x + m - 1) // m * m


def _layer_norm(h, gamma, beta, inv_d):
    # One-pass stats: var = E[h^2] - E[h]^2.  Clamp to >=0: in f32 the
    # difference can go slightly negative (beyond eps) when |mean| >> std,
    # which would NaN through rsqrt.
    s = jnp.sum(h, axis=-1, keepdims=True)
    ss = jnp.sum(h * h, axis=-1, keepdims=True)
    mean = s * inv_d
    var = jnp.maximum(ss * inv_d - mean * mean, 0.0)
    return (h - mean) * jax.lax.rsqrt(var + LN_EPS) * gamma + beta


def _leaky_relu(h):
    return jnp.where(h > 0, h, LEAKY_SLOPE * h)


def _stable_sigmoid(z):
    # exp of a non-positive argument only -> never overflows; exp and the
    # approximate reciprocal both go to the EUP slot (off the VPU path).
    e = jnp.exp(-jnp.abs(z))
    r = pl.reciprocal(1.0 + e, approx=True)
    return jnp.where(z >= 0, r, e * r)


def traj_pred_gaussian_kernel(
    x_ref, w1_ref, w2_ref, wh_ref, vecs_ref, bh_ref, out_ref,
    *, out_ch, max_sigma, min_sigma, inv_hidden,
):
    x = x_ref[...]
    mat_dt = w1_ref.dtype   # f32, or bf16 when use_bf16=True (MXU operands)

    # Static row slices of the packed (6, hidden) vector bundle.
    b1, g1, be1 = vecs_ref[0:1, :], vecs_ref[1:2, :], vecs_ref[2:3, :]
    b2, g2, be2 = vecs_ref[3:4, :], vecs_ref[4:5, :], vecs_ref[5:6, :]

    # fc[0]: Linear(in_channels -> hidden) + LayerNorm + LeakyReLU
    h = jnp.dot(x.astype(mat_dt), w1_ref[...],
                preferred_element_type=jnp.float32) + b1
    h = _layer_norm(h, g1, be1, inv_hidden)
    h = _leaky_relu(h)

    # fc[3]: Linear(hidden -> hidden) + LayerNorm + LeakyReLU
    h = jnp.dot(h.astype(mat_dt), w2_ref[...],
                preferred_element_type=jnp.float32) + b2
    h = _layer_norm(h, g2, be2, inv_hidden)
    h = _leaky_relu(h)

    # torch.relu(x)
    h = jnp.maximum(h, 0.0)

    # Fused heads: one matmul producing [mu | sigma_logits] on the lane axis.
    hd = jnp.dot(h.astype(mat_dt), wh_ref[...],
                 preferred_element_type=jnp.float32) + bh_ref[...]

    # sigma half: sigmoid, then affine remap into [min_sigma, max_sigma].
    sigma = min_sigma + (max_sigma - min_sigma) * _stable_sigmoid(hd)
    col = jax.lax.broadcasted_iota(jnp.int32, hd.shape, 1)
    out_ref[...] = jnp.where(col >= out_ch, sigma, hd).astype(out_ref.dtype)


def traj_pred_gaussian(x, params, *, max_sigma=10.0, min_sigma=0.0001,
                       tile_m=2048, use_bf16=False):
    """x: (N, in_channels) float32.  Returns (mu, sigma), each (N, out_channels)."""
    n, in_ch = x.shape
    hidden = params["w1"].shape[1]
    out_ch = params["wmu"].shape[1]

    # Grid-invariant weights: cast (tiny) in the wrapper.  Activations keep
    # their input dtype and are cast inside the kernel, so x is read once.
    mat_dtype = jnp.bfloat16 if use_bf16 else jnp.float32
    w1 = params["w1"].astype(mat_dtype)
    w2 = params["w2"].astype(mat_dtype)
    w_head = jnp.concatenate([params["wmu"], params["wsig"]], axis=1).astype(mat_dtype)
    b_head = jnp.concatenate([params["bmu"], params["bsig"]], axis=1)
    # Pack the six (1, hidden) vectors into a single (6, hidden) ref.
    vecs = jnp.concatenate([params["b1"], params["g1"], params["be1"],
                            params["b2"], params["g2"], params["be2"]], axis=0)

    # Batch tiling: round to sublane packing (16 rows for bf16, 8 for f32),
    # never exceed the batch, and keep >= ~4 grid steps for large N so the
    # two v7x TensorCores both get work and DMA/compute overlap survives.
    sub = 16 if use_bf16 else 8
    tile_m = _round_up(max(int(tile_m), sub), sub)
    tile_m = min(tile_m, _round_up(n, sub))
    if n > 4 * 512:
        tile_m = min(tile_m, _round_up(pl.cdiv(n, 4), sub))

    grid = (pl.cdiv(n, tile_m),)   # ragged last tile: Pallas masks reads/writes

    def bcast_spec(arr):
        return pl.BlockSpec(arr.shape, lambda i: (0,) * arr.ndim)

    kernel = functools.partial(
        traj_pred_gaussian_kernel,
        out_ch=out_ch, max_sigma=max_sigma, min_sigma=min_sigma,
        inv_hidden=1.0 / hidden,
    )

    out = pl.pallas_call(
        kernel,
        grid=grid,
        in_specs=[
            pl.BlockSpec((tile_m, in_ch), lambda i: (i, 0)),     # x (tiled)
            bcast_spec(w1), bcast_spec(w2), bcast_spec(w_head),  # weights
            bcast_spec(vecs), bcast_spec(b_head),                # LN/bias vectors
        ],
        out_specs=pl.BlockSpec((tile_m, 2 * out_ch), lambda i: (i, 0)),
        out_shape=jax.ShapeDtypeStruct((n, 2 * out_ch), jnp.float32),
        compiler_params=pltpu.CompilerParams(
            dimension_semantics=("parallel",)),
    )(x, w1, w2, w_head, vecs, b_head)

    return out[:, :out_ch], out[:, out_ch:]


def init_params(key, in_channels, out_channels, hidden_unit):
    ks = jax.random.split(key, 8)
    scale1 = 1.0 / jnp.sqrt(in_channels)
    scaleh = 1.0 / jnp.sqrt(hidden_unit)
    params = {
        # Linear(in_channels, hidden)
        "w1": jax.random.uniform(ks[0], (in_channels, hidden_unit), jnp.float32, -scale1, scale1),
        "b1": jax.random.uniform(ks[1], (1, hidden_unit), jnp.float32, -scale1, scale1),
        # LayerNorm(hidden)  (torch init: gamma=1, beta=0)
        "g1": jnp.ones((1, hidden_unit), jnp.float32),
        "be1": jnp.zeros((1, hidden_unit), jnp.float32),
        # Linear(hidden, hidden)
        "w2": jax.random.uniform(ks[2], (hidden_unit, hidden_unit), jnp.float32, -scaleh, scaleh),
        "b2": jax.random.uniform(ks[3], (1, hidden_unit), jnp.float32, -scaleh, scaleh),
        # LayerNorm(hidden)
        "g2": jnp.ones((1, hidden_unit), jnp.float32),
        "be2": jnp.zeros((1, hidden_unit), jnp.float32),
        # fc_mu
        "wmu": jax.random.uniform(ks[4], (hidden_unit, out_channels), jnp.float32, -scaleh, scaleh),
        "bmu": jax.random.uniform(ks[5], (1, out_channels), jnp.float32, -scaleh, scaleh),
        # fc_sigma
        "wsig": jax.random.uniform(ks[6], (hidden_unit, out_channels), jnp.float32, -scaleh, scaleh),
        "bsig": jax.random.uniform(ks[7], (1, out_channels), jnp.float32, -scaleh, scaleh),
    }
    return params


def _reference(x, p, max_sigma=10.0, min_sigma=0.0001):
    """Pure-JAX reference of the PyTorch forward."""
    def ln(h, g, b):
        m = jnp.mean(h, -1, keepdims=True)
        v = jnp.mean((h - m) ** 2, -1, keepdims=True)
        return (h - m) / jnp.sqrt(v + LN_EPS) * g + b

    h = x @ p["w1"] + p["b1"]
    h = ln(h, p["g1"], p["be1"])
    h = jnp.where(h > 0, h, LEAKY_SLOPE * h)
    h = h @ p["w2"] + p["b2"]
    h = ln(h, p["g2"], p["be2"])
    h = jnp.where(h > 0, h, LEAKY_SLOPE * h)
    h = jnp.maximum(h, 0.0)
    mu = h @ p["wmu"] + p["bmu"]
    sig = jax.nn.sigmoid(h @ p["wsig"] + p["bsig"])
    sigma = min_sigma + (max_sigma - min_sigma) * sig
    return mu, sigma


if __name__ == "__main__":
    key = jax.random.PRNGKey(0)
    kx, kx2, kp = jax.random.split(key, 3)

    # Small shapes consistent with the module: in=16, hidden=32, out=4.
    in_channels, hidden_unit, out_channels = 16, 32, 4
    params = init_params(kp, in_channels, out_channels, hidden_unit)

    # Case 1: tiny, non-multiple-of-8 batch -> single ragged tile (no pad copy).
    x = jax.random.normal(kx, (11, in_channels), dtype=jnp.float32)
    mu, sigma = traj_pred_gaussian(x, params)
    jax.block_until_ready((mu, sigma))
    mu_ref, sigma_ref = _reference(x, params)
    assert jnp.allclose(mu, mu_ref, atol=1e-4, rtol=1e-4)
    # sigma goes through the EUP approximate reciprocal -> slightly looser tol.
    assert jnp.allclose(sigma, sigma_ref, atol=1e-3, rtol=1e-2)

    # Case 2: multi-step grid with a ragged tail tile (300 = 2*128 + 44).
    x2 = jax.random.normal(kx2, (300, in_channels), dtype=jnp.float32)
    mu2, sigma2 = traj_pred_gaussian(x2, params, tile_m=128)
    jax.block_until_ready((mu2, sigma2))
    mu2_ref, sigma2_ref = _reference(x2, params)
    assert jnp.allclose(mu2, mu2_ref, atol=1e-4, rtol=1e-4)
    assert jnp.allclose(sigma2, sigma2_ref, atol=1e-3, rtol=1e-2)

    # Case 3: bf16 MXU operands (v6e/v7x path); f32 accumulation + f32 LN,
    # so only a smoke-level tolerance against the f32 reference.
    mu3, sigma3 = traj_pred_gaussian(x2, params, use_bf16=True)
    jax.block_until_ready((mu3, sigma3))
    assert jnp.allclose(mu3, mu2_ref, atol=0.1, rtol=0.1)
    assert jnp.allclose(sigma3, sigma2_ref, atol=0.1, rtol=0.1)

    print("KERNEL_OK")
</pallas_src>

<mosaic_0001>
module attributes {stable_mosaic.version = 11 : i64} {
  func.func @traj_pred_gaussian_kernel(%arg0: i32, %arg1: memref<16x16xf32, #tpu.memory_space<vmem>>, %arg2: memref<16x32xf32, #tpu.memory_space<vmem>>, %arg3: memref<32x32xf32, #tpu.memory_space<vmem>>, %arg4: memref<32x8xf32, #tpu.memory_space<vmem>>, %arg5: memref<6x32xf32, #tpu.memory_space<vmem>>, %arg6: memref<1x8xf32, #tpu.memory_space<vmem>>, %arg7: memref<16x8xf32, #tpu.memory_space<vmem>>) attributes {dimension_semantics = [#tpu.dimension_semantics<parallel>], iteration_bounds = array<i64: 1>, scalar_prefetch = 0 : i64, scratch_operands = 0 : i64, tpu.core_type = #tpu.core_type<tc>, window_params = [{transform_indices = @transform_0, window_bounds = array<i64: 16, 16>}, {pipeline_mode = #tpu.pipeline_mode<synchronous>, transform_indices = @transform_1, window_bounds = array<i64: 16, 32>}, {pipeline_mode = #tpu.pipeline_mode<synchronous>, transform_indices = @transform_2, window_bounds = array<i64: 32, 32>}, {pipeline_mode = #tpu.pipeline_mode<synchronous>, transform_indices = @transform_3, window_bounds = array<i64: 32, 8>}, {pipeline_mode = #tpu.pipeline_mode<synchronous>, transform_indices = @transform_4, window_bounds = array<i64: 6, 32>}, {pipeline_mode = #tpu.pipeline_mode<synchronous>, transform_indices = @transform_5, window_bounds = array<i64: 1, 8>}, {transform_indices = @transform_6, window_bounds = array<i64: 16, 8>}]} {
    %c0 = arith.constant 0 : index
    %c0_0 = arith.constant 0 : index
    %0 = vector.load %arg1[%c0, %c0_0] : memref<16x16xf32, #tpu.memory_space<vmem>>, vector<16x16xf32>
    %c0_1 = arith.constant 0 : index
    %c0_2 = arith.constant 0 : index
    %1 = vector.load %arg5[%c0_1, %c0_2] : memref<6x32xf32, #tpu.memory_space<vmem>>, vector<1x32xf32>
    %c1 = arith.constant 1 : index
    %c0_3 = arith.constant 0 : index
    %2 = vector.load %arg5[%c1, %c0_3] : memref<6x32xf32, #tpu.memory_space<vmem>>, vector<1x32xf32>
    %c2 = arith.constant 2 : index
    %c0_4 = arith.constant 0 : index
    %3 = vector.load %arg5[%c2, %c0_4] : memref<6x32xf32, #tpu.memory_space<vmem>>, vector<1x32xf32>
    %c3 = arith.constant 3 : index
    %c0_5 = arith.constant 0 : index
    %4 = vector.load %arg5[%c3, %c0_5] : memref<6x32xf32, #tpu.memory_space<vmem>>, vector<1x32xf32>
    %c4 = arith.constant 4 : index
    %c0_6 = arith.constant 0 : index
    %5 = vector.load %arg5[%c4, %c0_6] : memref<6x32xf32, #tpu.memory_space<vmem>>, vector<1x32xf32>
    %c5 = arith.constant 5 : index
    %c0_7 = arith.constant 0 : index
    %6 = vector.load %arg5[%c5, %c0_7] : memref<6x32xf32, #tpu.memory_space<vmem>>, vector<1x32xf32>
    %c0_8 = arith.constant 0 : index
    %c0_9 = arith.constant 0 : index
    %7 = vector.load %arg2[%c0_8, %c0_9] : memref<16x32xf32, #tpu.memory_space<vmem>>, vector<16x32xf32>
    %cst = arith.constant dense<0.000000e+00> : vector<16x32xf32>
    %8 = tpu.matmul %0, %7, %cst {dimension_numbers = #tpu.dot_dimension_numbers<[1], [0], [0], [1], [0, 0, 1, 1], [], []>} : vector<16x16xf32>, vector<16x32xf32>, vector<16x32xf32> -> vector<16x32xf32>
    %9 = vector.broadcast %1 : vector<1x32xf32> to vector<16x32xf32>
    %10 = arith.addf %8, %9 : vector<16x32xf32>
    %cst_10 = arith.constant dense<0.000000e+00> : vector<16xf32>
    %11 = vector.multi_reduction <add>, %10, %cst_10 [1] : vector<16x32xf32> to vector<16xf32>
    %12 = vector.shape_cast %11 : vector<16xf32> to vector<16x1xf32>
    %13 = arith.mulf %10, %10 : vector<16x32xf32>
    %cst_11 = arith.constant dense<0.000000e+00> : vector<16xf32>
    %14 = vector.multi_reduction <add>, %13, %cst_11 [1] : vector<16x32xf32> to vector<16xf32>
    %15 = vector.shape_cast %14 : vector<16xf32> to vector<16x1xf32>
    %cst_12 = arith.constant 3.125000e-02 : f32
    %16 = vector.broadcast %cst_12 : f32 to vector<16x1xf32>
    %17 = arith.mulf %12, %16 : vector<16x1xf32>
    %cst_13 = arith.constant 3.125000e-02 : f32
    %18 = vector.broadcast %cst_13 : f32 to vector<16x1xf32>
    %19 = arith.mulf %15, %18 : vector<16x1xf32>
    %20 = arith.mulf %17, %17 : vector<16x1xf32>
    %21 = arith.subf %19, %20 : vector<16x1xf32>
    %cst_14 = arith.constant 0.000000e+00 : f32
    %22 = vector.broadcast %cst_14 : f32 to vector<16x1xf32>
    %23 = arith.maximumf %21, %22 : vector<16x1xf32>
    %24 = vector.broadcast %17 : vector<16x1xf32> to vector<16x32xf32>
    %25 = arith.subf %10, %24 : vector<16x32xf32>
    %cst_15 = arith.constant 9.99999974E-6 : f32
    %26 = vector.broadcast %cst_15 : f32 to vector<16x1xf32>
    %27 = arith.addf %23, %26 : vector<16x1xf32>
    %28 = math.rsqrt %27 : vector<16x1xf32>
    %29 = vector.broadcast %28 : vector<16x1xf32> to vector<16x32xf32>
    %30 = arith.mulf %25, %29 : vector<16x32xf32>
    %31 = vector.broadcast %2 : vector<1x32xf32> to vector<16x32xf32>
    %32 = arith.mulf %30, %31 : vector<16x32xf32>
    %33 = vector.broadcast %3 : vector<1x32xf32> to vector<16x32xf32>
    %34 = arith.addf %32, %33 : vector<16x32xf32>
    %cst_16 = arith.constant 0.000000e+00 : f32
    %35 = vector.broadcast %cst_16 : f32 to vector<16x32xf32>
    %36 = arith.cmpf ogt, %34, %35 : vector<16x32xf32>
    %cst_17 = arith.constant 0.00999999977 : f32
    %37 = vector.broadcast %cst_17 : f32 to vector<16x32xf32>
    %38 = arith.mulf %37, %34 : vector<16x32xf32>
    %39 = arith.select %36, %34, %38 : vector<16x32xi1>, vector<16x32xf32>
    %c0_18 = arith.constant 0 : index
    %c0_19 = arith.constant 0 : index
    %40 = vector.load %arg3[%c0_18, %c0_19] : memref<32x32xf32, #tpu.memory_space<vmem>>, vector<32x32xf32>
    %cst_20 = arith.constant dense<0.000000e+00> : vector<16x32xf32>
    %41 = tpu.matmul %39, %40, %cst_20 {dimension_numbers = #tpu.dot_dimension_numbers<[1], [0], [0], [1], [0, 0, 1, 1], [], []>} : vector<16x32xf32>, vector<32x32xf32>, vector<16x32xf32> -> vector<16x32xf32>
    %42 = vector.broadcast %4 : vector<1x32xf32> to vector<16x32xf32>
    %43 = arith.addf %41, %42 : vector<16x32xf32>
    %cst_21 = arith.constant dense<0.000000e+00> : vector<16xf32>
    %44 = vector.multi_reduction <add>, %43, %cst_21 [1] : vector<16x32xf32> to vector<16xf32>
    %45 = vector.shape_cast %44 : vector<16xf32> to vector<16x1xf32>
    %46 = arith.mulf %43, %43 : vector<16x32xf32>
    %cst_22 = arith.constant dense<0.000000e+00> : vector<16xf32>
    %47 = vector.multi_reduction <add>, %46, %cst_22 [1] : vector<16x32xf32> to vector<16xf32>
    %48 = vector.shape_cast %47 : vector<16xf32> to vector<16x1xf32>
    %cst_23 = arith.constant 3.125000e-02 : f32
    %49 = vector.broadcast %cst_23 : f32 to vector<16x1xf32>
    %50 = arith.mulf %45, %49 : vector<16x1xf32>
    %cst_24 = arith.constant 3.125000e-02 : f32
    %51 = vector.broadcast %cst_24 : f32 to vector<16x1xf32>
    %52 = arith.mulf %48, %51 : vector<16x1xf32>
    %53 = arith.mulf %50, %50 : vector<16x1xf32>
    %54 = arith.subf %52, %53 : vector<16x1xf32>
    %cst_25 = arith.constant 0.000000e+00 : f32
    %55 = vector.broadcast %cst_25 : f32 to vector<16x1xf32>
    %56 = arith.maximumf %54, %55 : vector<16x1xf32>
    %57 = vector.broadcast %50 : vector<16x1xf32> to vector<16x32xf32>
    %58 = arith.subf %43, %57 : vector<16x32xf32>
    %cst_26 = arith.constant 9.99999974E-6 : f32
    %59 = vector.broadcast %cst_26 : f32 to vector<16x1xf32>
    %60 = arith.addf %56, %59 : vector<16x1xf32>
    %61 = math.rsqrt %60 : vector<16x1xf32>
    %62 = vector.broadcast %61 : vector<16x1xf32> to vector<16x32xf32>
    %63 = arith.mulf %58, %62 : vector<16x32xf32>
    %64 = vector.broadcast %5 : vector<1x32xf32> to vector<16x32xf32>
    %65 = arith.mulf %63, %64 : vector<16x32xf32>
    %66 = vector.broadcast %6 : vector<1x32xf32> to vector<16x32xf32>
    %67 = arith.addf %65, %66 : vector<16x32xf32>
    %cst_27 = arith.constant 0.000000e+00 : f32
    %68 = vector.broadcast %cst_27 : f32 to vector<16x32xf32>
    %69 = arith.cmpf ogt, %67, %68 : vector<16x32xf32>
    %cst_28 = arith.constant 0.00999999977 : f32
    %70 = vector.broadcast %cst_28 : f32 to vector<16x32xf32>
    %71 = arith.mulf %70, %67 : vector<16x32xf32>
    %72 = arith.select %69, %67, %71 : vector<16x32xi1>, vector<16x32xf32>
    %cst_29 = arith.constant 0.000000e+00 : f32
    %73 = vector.broadcast %cst_29 : f32 to vector<16x32xf32>
    %74 = arith.maximumf %72, %73 : vector<16x32xf32>
    %c0_30 = arith.constant 0 : index
    %c0_31 = arith.constant 0 : index
    %75 = vector.load %arg4[%c0_30, %c0_31] : memref<32x8xf32, #tpu.memory_space<vmem>>, vector<32x8xf32>
    %cst_32 = arith.constant dense<0.000000e+00> : vector<16x8xf32>
    %76 = tpu.matmul %74, %75, %cst_32 {dimension_numbers = #tpu.dot_dimension_numbers<[1], [0], [0], [1], [0, 0, 1, 1], [], []>} : vector<16x32xf32>, vector<32x8xf32>, vector<16x8xf32> -> vector<16x8xf32>
    %c0_33 = arith.constant 0 : index
    %c0_34 = arith.constant 0 : index
    %77 = vector.load %arg6[%c0_33, %c0_34] : memref<1x8xf32, #tpu.memory_space<vmem>>, vector<1x8xf32>
    %78 = vector.broadcast %77 : vector<1x8xf32> to vector<16x8xf32>
    %79 = arith.addf %76, %78 : vector<16x8xf32>
    %80 = math.absf %79 : vector<16x8xf32>
    %cst_35 = arith.constant 0.000000e+00 : f32
    %81 = vector.broadcast %cst_35 : f32 to vector<16x8xf32>
    %82 = arith.subf %81, %80 : vector<16x8xf32>
    %83 = math.exp %82 : vector<16x8xf32>
    %cst_36 = arith.constant 1.000000e+00 : f32
    %84 = vector.broadcast %cst_36 : f32 to vector<16x8xf32>
    %85 = arith.addf %84, %83 : vector<16x8xf32>
    %86 = tpu.reciprocal %85 {approx = true} : vector<16x8xf32> -> vector<16x8xf32>
    %cst_37 = arith.constant 0.000000e+00 : f32
    %87 = vector.broadcast %cst_37 : f32 to vector<16x8xf32>
    %88 = arith.cmpf oge, %79, %87 : vector<16x8xf32>
    %89 = arith.mulf %83, %86 : vector<16x8xf32>
    %90 = arith.select %88, %86, %89 : vector<16x8xi1>, vector<16x8xf32>
    %cst_38 = arith.constant 9.99989986 : f32
    %91 = vector.broadcast %cst_38 : f32 to vector<16x8xf32>
    %92 = arith.mulf %91, %90 : vector<16x8xf32>
    %cst_39 = arith.constant 9.99999974E-5 : f32
    %93 = vector.broadcast %cst_39 : f32 to vector<16x8xf32>
    %94 = arith.addf %93, %92 : vector<16x8xf32>
    %95 = tpu.iota {dimensions = array<i32: 1>} : vector<16x8xi32>
    %c4_i32 = arith.constant 4 : i32
    %96 = vector.broadcast %c4_i32 : i32 to vector<16x8xi32>
    %97 = arith.cmpi sge, %95, %96 : vector<16x8xi32>
    %98 = arith.select %97, %94, %79 : vector<16x8xi1>, vector<16x8xf32>
    %c0_40 = arith.constant 0 : index
    %c0_41 = arith.constant 0 : index
    %99 = vector.load %arg7[%c0_40, %c0_41] : memref<16x8xf32, #tpu.memory_space<vmem>>, vector<16x8xf32>
    tpu.vector_store %arg7[%c0_40, %c0_41], %98 {strides = array<i32>} : memref<16x8xf32, #tpu.memory_space<vmem>>, vector<16x8xf32>,
    return
  }
  func.func @transform_0(%arg0: i32) -> (i32, i32) {
    %c0_i32 = arith.constant 0 : i32
    %c0_i32_0 = arith.constant 0 : i32
    return %arg0, %c0_i32 : i32, i32
  }
  func.func @transform_1(%arg0: i32) -> (i32, i32) {
    %c0_i32 = arith.constant 0 : i32
    %c0_i32_0 = arith.constant 0 : i32
    %c0_i32_1 = arith.constant 0 : i32
    return %c0_i32, %c0_i32_0 : i32, i32
  }
  func.func @transform_2(%arg0: i32) -> (i32, i32) {
    %c0_i32 = arith.constant 0 : i32
    %c0_i32_0 = arith.constant 0 : i32
    %c0_i32_1 = arith.constant 0 : i32
    return %c0_i32, %c0_i32_0 : i32, i32
  }
  func.func @transform_3(%arg0: i32) -> (i32, i32) {
    %c0_i32 = arith.constant 0 : i32
    %c0_i32_0 = arith.constant 0 : i32
    %c0_i32_1 = arith.constant 0 : i32
    return %c0_i32, %c0_i32_0 : i32, i32
  }
  func.func @transform_4(%arg0: i32) -> (i32, i32) {
    %c0_i32 = arith.constant 0 : i32
    %c0_i32_0 = arith.constant 0 : i32
    %c0_i32_1 = arith.constant 0 : i32
    return %c0_i32, %c0_i32_0 : i32, i32
  }
  func.func @transform_5(%arg0: i32) -> (i32, i32) {
    %c0_i32 = arith.constant 0 : i32
    %c0_i32_0 = arith.constant 0 : i32
    %c0_i32_1 = arith.constant 0 : i32
    return %c0_i32, %c0_i32_0 : i32, i32
  }
  func.func @transform_6(%arg0: i32) -> (i32, i32) {
    %c0_i32 = arith.constant 0 : i32
    %c0_i32_0 = arith.constant 0 : i32
    return %arg0, %c0_i32 : i32, i32
  }
}

</mosaic_0001>

<llo_original>
// kernel: tpu_custom_call.1
$region0: #{tpu_custom_call.1}
  #allocation0 [shape = 'u32[]', space=smem, size = 0x4, offset = 0x4, fixed_abs, tag = 'smem constant byte address 0x4 - core index']
  #allocation1 [shape = 'u32[72,128]{1,0:T(1,128)}', space=vmem, size = 0x9000, scoped, tag = 'internal scratch']
  %s0 = inlined_call_operand.hbm [shape: f32[11,16], index: 0, kind: input, shape index: {}]
  %s1 = inlined_call_operand.hbm [shape: f32[16,32], index: 1, kind: input, shape index: {}]
  %s2 = inlined_call_operand.vmem [shape: f32[32,32], index: 2, kind: input, shape index: {}]
  %s3 = inlined_call_operand.vmem [shape: f32[32,8], index: 3, kind: input, shape index: {}]
  %s4 = inlined_call_operand.vmem [shape: f32[6,32], index: 4, kind: input, shape index: {}]
  %s5 = inlined_call_operand.vmem [shape: f32[1,8], index: 5, kind: input, shape index: {}]
  %s6 = inlined_call_operand.vmem [shape: f32[11,8], index: 6, kind: output, shape index: {}]
  %s7 = sld [smem:[#allocation0]]
  $region42: #{tpu_custom_call.1} parent=0
    _
  %s9 = ssub.s32 1, %s7
  %s10 = scalar_select 0, %s9, %s7
  $region1: #{tpu_custom_call.1} parent=0
    #allocation2 [shape = 'u8[8192]{0}', space=vmem, size = 0x2000, scoped, tag = 'input window, operand 0, single buffered']
    #allocation3 [shape = 's32[1]{0}', space=sflag, size = 0x4, scoped, tag = 'scoped memory for tpu_custom_call.1']
    #allocation4 [shape = 'u8[8192]{0}', space=vmem, size = 0x2000, scoped, tag = 'input window, operand 1, single buffered']
    #allocation5 [shape = 's32[1]{0}', space=sflag, size = 0x4, scoped, tag = 'scoped memory for tpu_custom_call.1']
    %11 = vsyncpa [#allocation3], 0
    %12 = vsyncpa [#allocation5], 0
    // Predicated region
    $region2: #{tpu_custom_call.1} parent=1 // pred_check
      _
    $region3: #{tpu_custom_call.1} parent=1 // pred_check_branch
      %14 = sbr.rel (0) target = $region5
    $region4: #{tpu_custom_call.1} parent=1 // pred_region
      %16 = vsyncadd [#allocation3], 0
      %s17 = sshll.u32 %s0, 4
      %s18 = int_to_ptr.hbm [resolvable:$true] %s17
      %s19 = sshll.u32 [#allocation2], 4
      %s20 = int_to_ptr.vmem [resolvable:$true] %s19
      %25 = dma.hbm_to_vmem [thread:$0]  %s18, 256, %s20, [#allocation3], 128, 128, 8
    $region5: #{tpu_custom_call.1} parent=1 // pred_fallthru
      _
    // Predicated region
    $region6: #{tpu_custom_call.1} parent=1 // pred_check
      _
    $region7: #{tpu_custom_call.1} parent=1 // pred_check_branch
      %27 = sbr.rel (0) target = $region9
    $region8: #{tpu_custom_call.1} parent=1 // pred_region
      %29 = vsyncadd [#allocation5], 0
      %s30 = sshll.u32 %s1, 4
      %s31 = int_to_ptr.hbm [resolvable:$true] %s30
      %s32 = sshll.u32 [#allocation4], 4
      %s33 = int_to_ptr.vmem [resolvable:$true] %s32
      %38 = dma.hbm_to_vmem [thread:$0]  %s31, 256, %s33, [#allocation5], 128, 128, 8
    $region9: #{tpu_custom_call.1} parent=1 // pred_fallthru
      _
    // Predicated region
    $region10: #{tpu_custom_call.1} parent=1 // pred_check
      _
    $region11: #{tpu_custom_call.1} parent=1 // pred_check_branch
      %40 = sbr.rel (0) target = $region13
    $region12: #{tpu_custom_call.1} parent=1 // pred_region
      _
    $region13: #{tpu_custom_call.1} parent=1 // pred_fallthru
      _
    // Predicated region
    $region14: #{tpu_custom_call.1} parent=1 // pred_check
      _
    $region15: #{tpu_custom_call.1} parent=1 // pred_check_branch
      %42 = sbr.rel (0) target = $region17
    $region16: #{tpu_custom_call.1} parent=1 // pred_region
      _
    $region17: #{tpu_custom_call.1} parent=1 // pred_fallthru
      _
    // Predicated region
    $region18: #{tpu_custom_call.1} parent=1 // pred_check
      _
    $region19: #{tpu_custom_call.1} parent=1 // pred_check_branch
      %44 = sbr.rel (0) target = $region21
    $region20: #{tpu_custom_call.1} parent=1 // pred_region
      _
    $region21: #{tpu_custom_call.1} parent=1 // pred_fallthru
      _
    // Predicated region
    $region22: #{tpu_custom_call.1} parent=1 // pred_check
      _
    $region23: #{tpu_custom_call.1} parent=1 // pred_check_branch
      %46 = sbr.rel (0) target = $region25
    $region24: #{tpu_custom_call.1} parent=1 // pred_region
      _
    $region25: #{tpu_custom_call.1} parent=1 // pred_fallthru
      _
    // Predicated region
    $region26: #{tpu_custom_call.1} parent=1 // pred_check
      _
    $region27: #{tpu_custom_call.1} parent=1 // pred_check_branch
      %48 = sbr.rel (0) target = $region29
    $region28: #{tpu_custom_call.1} parent=1 // pred_region
      %50 = dma.done [#allocation3], 256
    $region29: #{tpu_custom_call.1} parent=1 // pred_fallthru
      _
    // Predicated region
    $region30: #{tpu_custom_call.1} parent=1 // pred_check
      _
    $region31: #{tpu_custom_call.1} parent=1 // pred_check_branch
      %52 = sbr.rel (0) target = $region33
    $region32: #{tpu_custom_call.1} parent=1 // pred_region
      %54 = dma.done [#allocation5], 256
    $region33: #{tpu_custom_call.1} parent=1 // pred_fallthru
      _
    %v55 = vld [vmem:[#allocation2] sm:$0xff]
    %v56 = vld [vmem:[#allocation2 + $0x8] sm:$0xff]
    %v57 = vld [vmem:[%s4] sm:$0x1]
    %v58 = vld [vmem:[%s4 + $0x1] sm:$0x1]
    %v59 = vld [vmem:[%s4 + $0x2] sm:$0x1]
    %v60 = vld [vmem:[%s4 + $0x3] sm:$0x1]
    %v61 = vld [vmem:[%s4 + $0x4] sm:$0x1]
    %v62 = vld [vmem:[%s4 + $0x5] sm:$0x1]
    %v63 = vld [vmem:[#allocation4] sm:$0xff]
    %v64 = vld [vmem:[#allocation4 + $0x8] sm:$0xff]
    %v65 = vperm.slane %v57, 0
    %vm66 = vcmask 130048
    %v68 = vsel %vm66, %v55, 0
    %v71 = vsel %vm66, %v56, 0
    %73 = vmatpush.msra.mxu0 0.0
    %74 = vmatpush.msra.mxu0 0.0
    %75 = vmatpush.msra.mxu0 0.0
    %76 = vmatpush.msra.mxu0 0.0
    %77 = vmatpush.msra.mxu0 0.0
    %78 = vmatpush.msra.mxu0 0.0
    %79 = vmatpush.msra.mxu0 0.0
    %80 = vmatpush.msra.mxu0 0.0
    %81 = vmatpush.msra.mxu0 0.0
    %82 = vmatpush.msra.mxu0 0.0
    %83 = vmatpush.msra.mxu0 0.0
    %84 = vmatpush.msra.mxu0 0.0
    %85 = vmatpush.msra.mxu0 0.0
    %86 = vmatpush.msra.mxu0 0.0
    %87 = vmatpush.msra.mxu0 %v64
    %88 = vmatpush.msra.mxu0 %v63
    %89 = vmatmul.f32.gmra.mxu0 %v68
    %v90 = vpop.f32.mrf.mxu0
    %v91 = vadd.f32 %v65, %v90
    %92 = vmatmul.f32.gmra.mxu0 %v71
    %v93 = vpop.f32.mrf.mxu0
    %v94 = vadd.f32 %v65, %v93
    %95 = vdwg.mxu0
    %vm96 = vcmask 261120
    %v97 = vsel %vm96, %v91, 0.0
    %98 = vadd.xlane.f32.xlu0 %v97
    %v99 = vpop.xlane.xlu0 %98
    %v100 = vsel %vm96, %v94, 0.0
    %101 = vadd.xlane.f32.xlu0 %v100
    %v102 = vpop.xlane.xlu0 %101
    %v103 = vmul.f32 %v91, %v91
    %v104 = vmul.f32 %v94, %v94
    %v105 = vsel %vm96, %v103, 0.0
    %106 = vadd.xlane.f32.xlu0 %v105
    %v107 = vpop.xlane.xlu0 %106
    %v108 = vsel %vm96, %v104, 0.0
    %109 = vadd.xlane.f32.xlu0 %v108
    %v110 = vpop.xlane.xlu0 %109
    %v111 = vmul.f32 %v99, 0.03125
    %v112 = vmul.f32 %v102, 0.03125
    %v113 = vmul.f32 %v107, 0.03125
    %v114 = vmul.f32 %v110, 0.03125
    %v115 = vmul.f32 %v111, %v111
    %v116 = vmul.f32 %v112, %v112
    %v117 = vsub.f32 %v113, %v115
    %v118 = vsub.f32 %v114, %v116
    %v119 = vmax.f32 %v117, 0.0
    %v120 = vmax.f32 %v118, 0.0
    %v121 = vsub.f32 %v91, %v111
    %v122 = vsub.f32 %v94, %v112
    %v123 = vadd.f32 %v119, 1e-05
    %v124 = vadd.f32 %v120, 1e-05
    %v125 = vrsqrt.pop %v123
    %v126 = vmul.f32 %v125, %v123
    %v127 = vmul.f32 %v126, %v125
    %v128 = vmul.f32 0.5, %v127
    %v129 = vsub.f32 1.5, %v128
    %v130 = vmul.f32 %v125, %v129
    %vm131 = vweird.f32 %v123
    %vm132 = vweird.f32 %v125
    %vm133 = vmor %vm131, %vm132
    %v134 = vsel %vm133, %v125, %v130
    %v135 = vrsqrt.pop %v124
    %v136 = vmul.f32 %v135, %v124
    %v137 = vmul.f32 %v136, %v135
    %v138 = vmul.f32 0.5, %v137
    %v139 = vsub.f32 1.5, %v138
    %v140 = vmul.f32 %v135, %v139
    %vm141 = vweird.f32 %v124
    %vm142 = vweird.f32 %v135
    %vm143 = vmor %vm141, %vm142
    %v144 = vsel %vm143, %v135, %v140
    %v145 = vmul.f32 %v121, %v134
    %v146 = vmul.f32 %v122, %v144
    %v147 = vperm.slane %v58, 0
    %v148 = vmul.f32 %v145, %v147
    %v149 = vmul.f32 %v146, %v147
    %v150 = vperm.slane %v59, 0
    %v151 = vadd.f32 %v148, %v150
    %v152 = vadd.f32 %v149, %v150
    %vm153 = vcmp.gt.f32.partialorder %v151, 0.0
    %vm154 = vcmp.gt.f32.partialorder %v152, 0.0
    %v155 = vmul.f32 %v151, 0.01
    %v156 = vmul.f32 %v152, 0.01
    %v157 = vsel %vm153, %v151, %v155
    %v158 = vsel %vm154, %v152, %v156
    %v159 = vld [vmem:[%s2] sm:$0xff]
    %v160 = vld [vmem:[%s2 + $0x8] sm:$0xff]
    %v161 = vld [vmem:[%s2 + $0x10] sm:$0xff]
    %v162 = vld [vmem:[%s2 + $0x18] sm:$0xff]
    %v163 = vperm.slane %v60, 0
    %v165 = vsel %vm96, %v157, 0
    %v168 = vsel %vm96, %v158, 0
    %170 = vmatpush.msra.mxu0 0.0
    %171 = vmatpush.msra.mxu0 0.0
    %172 = vmatpush.msra.mxu0 0.0
    %173 = vmatpush.msra.mxu0 0.0
    %174 = vmatpush.msra.mxu0 0.0
    %175 = vmatpush.msra.mxu0 0.0
    %176 = vmatpush.msra.mxu0 0.0
    %177 = vmatpush.msra.mxu0 0.0
    %178 = vmatpush.msra.mxu0 0.0
    %179 = vmatpush.msra.mxu0 0.0
    %180 = vmatpush.msra.mxu0 0.0
    %181 = vmatpush.msra.mxu0 0.0
    %182 = vmatpush.msra.mxu0 %v162
    %183 = vmatpush.msra.mxu0 %v161
    %184 = vmatpush.msra.mxu0 %v160
    %185 = vmatpush.msra.mxu0 %v159
    %186 = vmatmul.f32.gmra.mxu0 %v165
    %v187 = vpop.f32.mrf.mxu0
    %v188 = vadd.f32 %v163, %v187
    %189 = vmatmul.f32.gmra.mxu0 %v168
    %v190 = vpop.f32.mrf.mxu0
    %v191 = vadd.f32 %v163, %v190
    %192 = vdwg.mxu0
    %v193 = vsel %vm96, %v188, 0.0
    %194 = vadd.xlane.f32.xlu0 %v193
    %v195 = vpop.xlane.xlu0 %194
    %v196 = vsel %vm96, %v191, 0.0
    %197 = vadd.xlane.f32.xlu0 %v196
    %v198 = vpop.xlane.xlu0 %197
    %v199 = vmul.f32 %v188, %v188
    %v200 = vmul.f32 %v191, %v191
    %v201 = vsel %vm96, %v199, 0.0
    %202 = vadd.xlane.f32.xlu0 %v201
    %v203 = vpop.xlane.xlu0 %202
    %v204 = vsel %vm96, %v200, 0.0
    %205 = vadd.xlane.f32.xlu0 %v204
    %v206 = vpop.xlane.xlu0 %205
    %v207 = vmul.f32 %v195, 0.03125
    %v208 = vmul.f32 %v198, 0.03125
    %v209 = vmul.f32 %v203, 0.03125
    %v210 = vmul.f32 %v206, 0.03125
    %v211 = vmul.f32 %v207, %v207
    %v212 = vmul.f32 %v208, %v208
    %v213 = vsub.f32 %v209, %v211
    %v214 = vsub.f32 %v210, %v212
    %v215 = vmax.f32 %v213, 0.0
    %v216 = vmax.f32 %v214, 0.0
    %v217 = vsub.f32 %v188, %v207
    %v218 = vsub.f32 %v191, %v208
    %v219 = vadd.f32 %v215, 1e-05
    %v220 = vadd.f32 %v216, 1e-05
    %v221 = vrsqrt.pop %v219
    %v222 = vmul.f32 %v221, %v219
    %v223 = vmul.f32 %v222, %v221
    %v224 = vmul.f32 0.5, %v223
    %v225 = vsub.f32 1.5, %v224
    %v226 = vmul.f32 %v221, %v225
    %vm227 = vweird.f32 %v219
    %vm228 = vweird.f32 %v221
    %vm229 = vmor %vm227, %vm228
    %v230 = vsel %vm229, %v221, %v226
    %v231 = vrsqrt.pop %v220
    %v232 = vmul.f32 %v231, %v220
    %v233 = vmul.f32 %v232, %v231
    %v234 = vmul.f32 0.5, %v233
    %v235 = vsub.f32 1.5, %v234
    %v236 = vmul.f32 %v231, %v235
    %vm237 = vweird.f32 %v220
    %vm238 = vweird.f32 %v231
    %vm239 = vmor %vm237, %vm238
    %v240 = vsel %vm239, %v231, %v236
    %v241 = vmul.f32 %v217, %v230
    %v242 = vmul.f32 %v218, %v240
    %v243 = vperm.slane %v61, 0
    %v244 = vmul.f32 %v241, %v243
    %v245 = vmul.f32 %v242, %v243
    %v246 = vperm.slane %v62, 0
    %v247 = vadd.f32 %v244, %v246
    %v248 = vadd.f32 %v245, %v246
    %vm249 = vcmp.gt.f32.partialorder %v247, 0.0
    %vm250 = vcmp.gt.f32.partialorder %v248, 0.0
    %v251 = vmul.f32 %v247, 0.01
    %v252 = vmul.f32 %v248, 0.01
    %v253 = vsel %vm249, %v247, %v251
    %v254 = vsel %vm250, %v248, %v252
    %v255 = vmax.f32 %v253, 0.0
    %v256 = vmax.f32 %v254, 0.0
    %v257 = vld [vmem:[%s3] sm:$0xff]
    %v258 = vld [vmem:[%s3 + $0x8] sm:$0xff]
    %v259 = vld [vmem:[%s3 + $0x10] sm:$0xff]
    %v260 = vld [vmem:[%s3 + $0x18] sm:$0xff]
    %v261 = vld [vmem:[%s5] sm:$0x1]
    %v263 = vperm.slane %v261, 0
    %v266 = vsel %vm96, %v255, 0
    %v269 = vsel %vm96, %v256, 0
    %271 = vmatpush.msra.mxu0 0.0
    %272 = vmatpush.msra.mxu0 0.0
    %273 = vmatpush.msra.mxu0 0.0
    %274 = vmatpush.msra.mxu0 0.0
    %275 = vmatpush.msra.mxu0 0.0
    %276 = vmatpush.msra.mxu0 0.0
    %277 = vmatpush.msra.mxu0 0.0
    %278 = vmatpush.msra.mxu0 0.0
    %279 = vmatpush.msra.mxu0 0.0
    %280 = vmatpush.msra.mxu0 0.0
    %281 = vmatpush.msra.mxu0 0.0
    %282 = vmatpush.msra.mxu0 0.0
    %283 = vmatpush.msra.mxu0 %v260
    %284 = vmatpush.msra.mxu0 %v259
    %285 = vmatpush.msra.mxu0 %v258
    %286 = vmatpush.msra.mxu0 %v257
    %287 = vmatmul.f32.gmra.mxu0 %v266
    %v288 = vpop.f32.mrf.mxu0
    %v289 = vadd.f32 %v263, %v288
    %290 = vmatmul.f32.gmra.mxu0 %v269
    %v291 = vpop.f32.mrf.mxu0
    %v292 = vadd.f32 %v263, %v291
    %293 = vdwg.mxu0
    %v294 = vand.u32 2147483647, %v289
    %v295 = vand.u32 2147483647, %v292
    %v296 = vsub.f32 0.0, %v294
    %v297 = vsub.f32 0.0, %v295
    %v298 = vmul.f32 %v296, 1.442695
    %v299 = vpow.pop %v298
    %v300 = vmul.f32 %v297, 1.442695
    %v301 = vpow.pop %v300
    %v302 = vadd.f32 %v299, 1.0
    %v303 = vadd.f32 %v301, 1.0
    %v304 = vrcp.pop %v302
    %v305 = vrcp.pop %v303
    %vm306 = vcmp.ge.f32.partialorder %v289, 0.0
    %vm307 = vcmp.ge.f32.partialorder %v292, 0.0
    %v308 = vmul.f32 %v299, %v304
    %v309 = vmul.f32 %v301, %v305
    %v310 = vsel %vm306, %v304, %v308
    %v311 = vsel %vm307, %v305, %v309
    %v312 = vmul.f32 %v310, 9.9999
    %v313 = vmul.f32 %v311, 9.9999
    %v314 = vadd.f32 %v312, 0.0001
    %v315 = vadd.f32 %v313, 0.0001
    %v316 = vlaneseq
    %v317 = vand.u32 %v316, 127
    %vm318 = vcmp.ge.s32.totalorder %v317, 4
    %v319 = vsel %vm318, %v314, %v289
    %v320 = vsel %vm318, %v315, %v292
    %vm321 = vcmask 64512
    %322 = vst.msk [vmem:[%s6] sm:$0xff] %vm321, %v319
    %323 = vst.msk [vmem:[%s6 + $0x8] sm:$0xff] %vm321, %v320
    // Predicated region
    $region34: #{tpu_custom_call.1} parent=1 // pred_check
      _
    $region35: #{tpu_custom_call.1} parent=1 // pred_check_branch
      %325 = sbr.rel (0) target = $region37
    $region36: #{tpu_custom_call.1} parent=1 // pred_region
      _
    $region37: #{tpu_custom_call.1} parent=1 // pred_fallthru
      _
    // Predicated region
    $region38: #{tpu_custom_call.1} parent=1 // pred_check
      _
    $region39: #{tpu_custom_call.1} parent=1 // pred_check_branch
      %327 = sbr.rel (0) target = $region41
    $region40: #{tpu_custom_call.1} parent=1 // pred_region
      _
    $region41: #{tpu_custom_call.1} parent=1 // pred_fallthru
      _
    %328 = vsyncpa [#allocation3], 1
    %329 = vsyncpa [#allocation5], 1

</llo_original>
